<compile_context>
chip_gen: v7x
topology: tpu7x:2x2x1
jax: 0.10.0
libtpu: 0.0.40
codegen_flags: <defaults>
</compile_context>

<pallas_src>
import functools

import jax
import jax.numpy as jnp
from jax import lax
from jax.experimental import pallas as pl
from jax.experimental.pallas import tpu as pltpu


def _mlp_kernel(x_ref, p_ref, o_ref, *, n_in, n_hidden, n_out, classification):
    """Batch-on-lanes fused MLP.

    x_ref: (TB, n_in)  natural PyTorch layout (batch on sublanes here only).
    p_ref: (R, C)      packed weights/biases (see pack_params for layout).
    o_ref: (n_out, TB) lane-dense output slab (batch on lanes).
    """
    H = n_hidden
    xb = x_ref[...]                                        # (TB, n_in)

    # Static slices of the packed parameter buffer (single VMEM-resident DMA).
    w1 = p_ref[0:H, 0:n_in]                                # (H, n_in)
    w2 = p_ref[0:H, n_in:n_in + H]                         # (H, H)
    w3 = p_ref[0:H, n_in + H:n_in + 2 * H]                 # (H, H)
    w4 = p_ref[0:n_out, n_in + 2 * H:n_in + 3 * H]         # (n_out, H)
    boff = n_in + 3 * H
    b1 = p_ref[0:H, boff + 0:boff + 1]                     # (H, 1)
    b2 = p_ref[0:H, boff + 1:boff + 2]
    b3 = p_ref[0:H, boff + 2:boff + 3]
    b4 = p_ref[0:n_out, boff + 3:boff + 4]                 # (n_out, 1)

    # Layer 1: contract the last axes of w1 (H, n_in) and xb (TB, n_in)
    # -> (H, TB).  This is the trans-B matmul; batch rides the 128-lane axis
    # for every subsequent op, so stores stay lane-dense.
    dn = (((1,), (1,)), ((), ()))
    h = jnp.tanh(lax.dot_general(w1, xb, dn,
                                 preferred_element_type=jnp.float32) + b1)
    h = jnp.tanh(jnp.dot(w2, h, preferred_element_type=jnp.float32) + b2)
    h = jnp.tanh(jnp.dot(w3, h, preferred_element_type=jnp.float32) + b3)
    y = jnp.dot(w4, h, preferred_element_type=jnp.float32) + b4   # (n_out, TB)

    if classification:
        # nn.Softmax(dim=1) on (B, n_out) == softmax over the class axis,
        # which is the sublane axis (axis 0) in this transposed layout.
        m = jnp.max(y, axis=0, keepdims=True)
        e = jnp.exp(y - m)
        y = e / jnp.sum(e, axis=0, keepdims=True)          # exact normalize

    o_ref[...] = y.astype(o_ref.dtype)


def _pick_tile_b(B):
    # Prefer the biggest lane-dense tile that still gives >= 2 grid steps
    # (pipelining has something to overlap; v7x can use both TensorCores).
    for t in (8192, 4096, 2048, 1024, 512, 256, 128):
        if B >= 2 * t:
            return t
    return 128  # tiny batches: one (possibly ragged) 128-wide tile


def pack_params(params, n_in, n_hidden, n_out):
    """Pack w1..w4, b1..b4 into one (rows, 128k) f32 buffer (single DMA stream).

    Column layout: [w1 | w2 | w3 | w4 (rows 0:n_out) | b1 b2 b3 b4 | zero pad].
    """
    H = n_hidden
    assert n_out <= H
    rows = ((H + 7) // 8) * 8
    cols = n_in + 3 * H + 4
    C = ((max(cols, 128) + 127) // 128) * 128
    P = jnp.zeros((rows, C), jnp.float32)
    P = P.at[0:H, 0:n_in].set(params["w1"])
    P = P.at[0:H, n_in:n_in + H].set(params["w2"])
    P = P.at[0:H, n_in + H:n_in + 2 * H].set(params["w3"])
    P = P.at[0:n_out, n_in + 2 * H:n_in + 3 * H].set(params["w4"])
    boff = n_in + 3 * H
    P = P.at[0:H, boff + 0:boff + 1].set(params["b1"])
    P = P.at[0:H, boff + 1:boff + 2].set(params["b2"])
    P = P.at[0:H, boff + 2:boff + 3].set(params["b3"])
    P = P.at[0:n_out, boff + 3:boff + 4].set(params["b4"])
    return P


def nn_model_forward(x, packed, *, n_in, n_hidden, n_out,
                     purpose="classification", tile_b=None):
    """Fused MLP forward.  x: (B, n_in) float32; packed: pack_params output."""
    B, nin = x.shape
    assert nin == n_in
    if tile_b is None:
        tile_b = _pick_tile_b(B)
    assert tile_b % 128 == 0, "tile_b must be a multiple of 128 (lane axis)"

    num_tiles = pl.cdiv(B, tile_b)
    kernel = functools.partial(_mlp_kernel, n_in=n_in, n_hidden=n_hidden,
                               n_out=n_out,
                               classification=(purpose == "classification"))

    out_t = pl.pallas_call(
        kernel,
        out_shape=jax.ShapeDtypeStruct((n_out, B), jnp.float32),
        grid_spec=pltpu.PrefetchScalarGridSpec(
            num_scalar_prefetch=0,
            grid=(num_tiles,),
            in_specs=[
                # Natural (B, n_in) layout; ragged last tile handled by Pallas
                # (garbage rows are column-local and never written back).
                pl.BlockSpec((tile_b, n_in), lambda i: (i, 0)),
                # Packed params: whole buffer resident in VMEM, one DMA stream.
                pl.BlockSpec(packed.shape, lambda i: (0, 0)),
            ],
            out_specs=pl.BlockSpec((n_out, tile_b), lambda i: (0, i)),
        ),
        compiler_params=pltpu.CompilerParams(
            dimension_semantics=("parallel",)),
    )(x, packed)

    return out_t.T  # (B, n_out); tiny (B*n_out) transpose, layout plumbing only


def init_params(key, n_in, n_hidden, n_out):
    """nn.Linear-style init; weights in PyTorch-native (out, in) layout,
    biases as (out, 1)."""
    if n_hidden < 2:
        raise ValueError("Number of hidden layers must be above 1")
    ks = jax.random.split(key, 8)

    def linear(kw, kb, fan_in, fan_out):
        bound = 1.0 / jnp.sqrt(fan_in)
        w = jax.random.uniform(kw, (fan_out, fan_in), jnp.float32, -bound, bound)
        b = jax.random.uniform(kb, (fan_out, 1), jnp.float32, -bound, bound)
        return w, b

    w1, b1 = linear(ks[0], ks[1], n_in, n_hidden)
    w2, b2 = linear(ks[2], ks[3], n_hidden, n_hidden)
    w3, b3 = linear(ks[4], ks[5], n_hidden, n_hidden)
    w4, b4 = linear(ks[6], ks[7], n_hidden, n_out)
    return dict(w1=w1, b1=b1, w2=w2, b2=b2, w3=w3, b3=b3, w4=w4, b4=b4)


def reference_forward(x, p, purpose):
    h = jnp.tanh(x @ p["w1"].T + p["b1"].T)
    h = jnp.tanh(h @ p["w2"].T + p["b2"].T)
    h = jnp.tanh(h @ p["w3"].T + p["b3"].T)
    y = h @ p["w4"].T + p["b4"].T
    if purpose == "classification":
        y = jax.nn.softmax(y, axis=1)
    return y


if __name__ == "__main__":
    n_in, n_hidden, n_out = 16, 32, 4
    batch = 1024          # big enough for real batch tiling
    tile_b = 512          # exactly 2 grid steps: pipelined + v7x 2-TC friendly
    purpose = "classification"

    key = jax.random.PRNGKey(0)
    kx, kp = jax.random.split(key)
    x = jax.random.normal(kx, (batch, n_in), dtype=jnp.float32)
    params = init_params(kp, n_in, n_hidden, n_out)
    packed = pack_params(params, n_in, n_hidden, n_out)   # one-time packing

    out = nn_model_forward(x, packed, n_in=n_in, n_hidden=n_hidden,
                           n_out=n_out, purpose=purpose, tile_b=tile_b)
    out = jax.block_until_ready(out)

    ref = reference_forward(x, params, purpose)
    assert out.shape == (batch, n_out)
    assert jnp.allclose(out, ref, atol=1e-4, rtol=1e-4), "mismatch vs reference"

    print("KERNEL_OK")
</pallas_src>

<mosaic_0001>
module attributes {stable_mosaic.version = 11 : i64} {
  func.func @_mlp_kernel(%arg0: i32, %arg1: memref<512x16xf32, #tpu.memory_space<vmem>>, %arg2: memref<32x128xf32, #tpu.memory_space<vmem>>, %arg3: memref<4x512xf32, #tpu.memory_space<vmem>>) attributes {dimension_semantics = [#tpu.dimension_semantics<parallel>], iteration_bounds = array<i64: 2>, scalar_prefetch = 0 : i64, scratch_operands = 0 : i64, tpu.core_type = #tpu.core_type<tc>, window_params = [{transform_indices = @transform_0, window_bounds = array<i64: 512, 16>}, {pipeline_mode = #tpu.pipeline_mode<synchronous>, transform_indices = @transform_1, window_bounds = array<i64: 32, 128>}, {transform_indices = @transform_2, window_bounds = array<i64: 4, 512>}]} {
    %c0 = arith.constant 0 : index
    %c0_0 = arith.constant 0 : index
    %0 = vector.load %arg1[%c0, %c0_0] : memref<512x16xf32, #tpu.memory_space<vmem>>, vector<512x16xf32>
    %c0_1 = arith.constant 0 : index
    %c0_2 = arith.constant 0 : index
    %1 = vector.load %arg2[%c0_1, %c0_2] : memref<32x128xf32, #tpu.memory_space<vmem>>, vector<32x16xf32>
    %c0_3 = arith.constant 0 : index
    %c16 = arith.constant 16 : index
    %2 = vector.load %arg2[%c0_3, %c16] : memref<32x128xf32, #tpu.memory_space<vmem>>, vector<32x32xf32>
    %c0_4 = arith.constant 0 : index
    %c48 = arith.constant 48 : index
    %3 = vector.load %arg2[%c0_4, %c48] : memref<32x128xf32, #tpu.memory_space<vmem>>, vector<32x32xf32>
    %c0_5 = arith.constant 0 : index
    %c80 = arith.constant 80 : index
    %4 = vector.load %arg2[%c0_5, %c80] : memref<32x128xf32, #tpu.memory_space<vmem>>, vector<4x32xf32>
    %c0_6 = arith.constant 0 : index
    %c112 = arith.constant 112 : index
    %5 = vector.load %arg2[%c0_6, %c112] : memref<32x128xf32, #tpu.memory_space<vmem>>, vector<32x1xf32>
    %c0_7 = arith.constant 0 : index
    %c113 = arith.constant 113 : index
    %6 = vector.load %arg2[%c0_7, %c113] : memref<32x128xf32, #tpu.memory_space<vmem>>, vector<32x1xf32>
    %c0_8 = arith.constant 0 : index
    %c114 = arith.constant 114 : index
    %7 = vector.load %arg2[%c0_8, %c114] : memref<32x128xf32, #tpu.memory_space<vmem>>, vector<32x1xf32>
    %c0_9 = arith.constant 0 : index
    %c115 = arith.constant 115 : index
    %8 = vector.load %arg2[%c0_9, %c115] : memref<32x128xf32, #tpu.memory_space<vmem>>, vector<4x1xf32>
    %cst = arith.constant dense<0.000000e+00> : vector<32x512xf32>
    %9 = tpu.matmul %1, %0, %cst {dimension_numbers = #tpu.dot_dimension_numbers<[1], [1], [0], [0], [0, 0, 1, 0], [], []>} : vector<32x16xf32>, vector<512x16xf32>, vector<32x512xf32> -> vector<32x512xf32>
    %10 = vector.broadcast %5 : vector<32x1xf32> to vector<32x512xf32>
    %11 = arith.addf %9, %10 : vector<32x512xf32>
    %12 = math.tanh %11 : vector<32x512xf32>
    %cst_10 = arith.constant dense<0.000000e+00> : vector<32x512xf32>
    %13 = tpu.matmul %2, %12, %cst_10 {dimension_numbers = #tpu.dot_dimension_numbers<[1], [0], [0], [1], [0, 0, 1, 1], [], []>} : vector<32x32xf32>, vector<32x512xf32>, vector<32x512xf32> -> vector<32x512xf32>
    %14 = vector.broadcast %6 : vector<32x1xf32> to vector<32x512xf32>
    %15 = arith.addf %13, %14 : vector<32x512xf32>
    %16 = math.tanh %15 : vector<32x512xf32>
    %cst_11 = arith.constant dense<0.000000e+00> : vector<32x512xf32>
    %17 = tpu.matmul %3, %16, %cst_11 {dimension_numbers = #tpu.dot_dimension_numbers<[1], [0], [0], [1], [0, 0, 1, 1], [], []>} : vector<32x32xf32>, vector<32x512xf32>, vector<32x512xf32> -> vector<32x512xf32>
    %18 = vector.broadcast %7 : vector<32x1xf32> to vector<32x512xf32>
    %19 = arith.addf %17, %18 : vector<32x512xf32>
    %20 = math.tanh %19 : vector<32x512xf32>
    %cst_12 = arith.constant dense<0.000000e+00> : vector<4x512xf32>
    %21 = tpu.matmul %4, %20, %cst_12 {dimension_numbers = #tpu.dot_dimension_numbers<[1], [0], [0], [1], [0, 0, 1, 1], [], []>} : vector<4x32xf32>, vector<32x512xf32>, vector<4x512xf32> -> vector<4x512xf32>
    %22 = vector.broadcast %8 : vector<4x1xf32> to vector<4x512xf32>
    %23 = arith.addf %21, %22 : vector<4x512xf32>
    %cst_13 = arith.constant dense<0xFF800000> : vector<512xf32>
    %24 = vector.multi_reduction <maximumf>, %23, %cst_13 [0] : vector<4x512xf32> to vector<512xf32>
    %25 = vector.shape_cast %24 : vector<512xf32> to vector<1x512xf32>
    %26 = vector.broadcast %25 : vector<1x512xf32> to vector<4x512xf32>
    %27 = arith.subf %23, %26 : vector<4x512xf32>
    %28 = math.exp %27 : vector<4x512xf32>
    %cst_14 = arith.constant dense<0.000000e+00> : vector<512xf32>
    %29 = vector.multi_reduction <add>, %28, %cst_14 [0] : vector<4x512xf32> to vector<512xf32>
    %30 = vector.shape_cast %29 : vector<512xf32> to vector<1x512xf32>
    %31 = vector.broadcast %30 : vector<1x512xf32> to vector<4x512xf32>
    %32 = arith.divf %28, %31 : vector<4x512xf32>
    %c0_15 = arith.constant 0 : index
    %c0_16 = arith.constant 0 : index
    %33 = vector.load %arg3[%c0_15, %c0_16] : memref<4x512xf32, #tpu.memory_space<vmem>>, vector<4x512xf32>
    tpu.vector_store %arg3[%c0_15, %c0_16], %32 {strides = array<i32>} : memref<4x512xf32, #tpu.memory_space<vmem>>, vector<4x512xf32>,
    return
  }
  func.func @transform_0(%arg0: i32) -> (i32, i32) {
    %c0_i32 = arith.constant 0 : i32
    %c0_i32_0 = arith.constant 0 : i32
    return %arg0, %c0_i32 : i32, i32
  }
  func.func @transform_1(%arg0: i32) -> (i32, i32) {
    %c0_i32 = arith.constant 0 : i32
    %c0_i32_0 = arith.constant 0 : i32
    %c0_i32_1 = arith.constant 0 : i32
    return %c0_i32, %c0_i32_0 : i32, i32
  }
  func.func @transform_2(%arg0: i32) -> (i32, i32) {
    %c0_i32 = arith.constant 0 : i32
    %c0_i32_0 = arith.constant 0 : i32
    return %c0_i32, %arg0 : i32, i32
  }
}

</mosaic_0001>

<llo_original>
// kernel: tpu_custom_call.1
$region0: #{tpu_custom_call.1}
  #allocation0 [shape = 'u32[]', space=smem, size = 0x4, offset = 0x4, fixed_abs, tag = 'smem constant byte address 0x4 - core index']
  #allocation1 [shape = 'u32[144,128]{1,0:T(1,128)}', space=vmem, size = 0x12000, scoped, tag = 'internal scratch']
  %s0 = inlined_call_operand.vmem [shape: f32[1024,16], index: 0, kind: input, shape index: {}]
  %s1 = inlined_call_operand.vmem [shape: f32[32,128], index: 1, kind: input, shape index: {}]
  %s2 = inlined_call_operand.hbm [shape: f32[4,1024], index: 2, kind: output, shape index: {}]
  %s3 = sld [smem:[#allocation0]]
  $region41: #{tpu_custom_call.1} parent=0
    _
  %s5 = ssub.s32 1, %s3
  %s6 = scalar_select 0, %s5, %s3
  $region1: #{tpu_custom_call.1} parent=0
    #allocation2 [shape = 'u8[16384]{0}', space=vmem, size = 0x4000, scoped, tag = 'output window, operand 0']
    #allocation3 [shape = 's32[2]{0}', space=sflag, size = 0x8, scoped, tag = 'scoped memory for tpu_custom_call.1']
    %7 = vsyncpa [#allocation3], 0
    %s8 = scalar_lea.sflag [#allocation3], 1
    %9 = vsyncpa %s8, 0
    loop: start=0, step=1, limit=4
    $region2: #{tpu_custom_call.1} parent=1 // loop_pre_header
      _
    $region3: #{tpu_custom_call.1} parent=1 // loop_header
      %s11 = sphi 0, %s15
      %p12 = scmp.ge.s32.totalorder %s11, 4
      %s21 = sphi 0, %s23
      %s24 = sphi 0, %s21
      %s25 = sphi 0, %s24
      %s41 = sphi 0, %s25
      %s45 = sphi 0, %s45
      %s47 = sphi 0, %s45
      %s48 = sphi 0, %s47
      %s62 = sphi 0, %s48
      %s68 = sphi 0, %s70
      %s71 = sphi 0, %s68
      %s72 = sphi 0, %s71
      %s88 = sphi 0, %s72
    $region4: #{tpu_custom_call.1} parent=1 // loop_header_branch
      %14 = sbr.rel (%p12) target = $region8
    $region5: #{tpu_custom_call.1} parent=1 // loop_body
      %s16 = ssub.s32 %s11, 1
      %s17 = ssub.s32 %s11, 2
      %s18 = sadd.s32 %s11, 1
      %s19 = ssub.s32 %s11, %s18
      %p20 = scmp.eq.s32.totalorder %s19, 0
      %s22 = sadd.s32 %s21, 1
      %s23 = scalar_select %p20, %s21, %s22
      %p26 = pneg %p20
      %p27 = scmp.eq.s32.totalorder %s11, 1
      %p28 = por %p26, %p27
      %p29 = scmp.ne.s32.totalorder %s21, %s24
      %p30 = scmp.eq.s32.totalorder %s11, 0
      %p31 = por %p29, %p30
      %p32 = scmp.ne.s32.totalorder %s21, %s24
      %p33 = scmp.eq.s32.totalorder %s16, 1
      %p34 = por %p32, %p33
      %p35 = scmp.ne.s32.totalorder %s24, %s25
      %p36 = scmp.eq.s32.totalorder %s16, 0
      %p37 = por %p35, %p36
      %p38 = scmp.ne.s32.totalorder %s24, %s25
      %p39 = scmp.eq.s32.totalorder %s17, 1
      %p40 = por %p38, %p39
      %p42 = scmp.ne.s32.totalorder %s25, %s41
      %p43 = scmp.eq.s32.totalorder %s17, 0
      %p44 = por %p42, %p43
      %s46 = sadd.s32 %s45, 1
      %p49 = scmp.eq.s32.totalorder %s11, 1
      %p50 = scmp.ne.s32.totalorder %s45, %s47
      %p51 = scmp.eq.s32.totalorder %s11, 0
      %p52 = por %p50, %p51
      %p53 = scmp.ne.s32.totalorder %s45, %s47
      %p54 = scmp.eq.s32.totalorder %s16, 1
      %p55 = por %p53, %p54
      %p56 = scmp.ne.s32.totalorder %s47, %s48
      %p57 = scmp.eq.s32.totalorder %s16, 0
      %p58 = por %p56, %p57
      %p59 = scmp.ne.s32.totalorder %s47, %s48
      %p60 = scmp.eq.s32.totalorder %s17, 1
      %p61 = por %p59, %p60
      %p63 = scmp.ne.s32.totalorder %s48, %s62
      %p64 = scmp.eq.s32.totalorder %s17, 0
      %p65 = por %p63, %p64
      %s66 = ssub.s32 %s11, %s18
      %p67 = scmp.eq.s32.totalorder %s66, 0
      %s69 = sadd.s32 %s68, 1
      %s70 = scalar_select %p67, %s68, %s69
      %p73 = pneg %p67
      %p74 = scmp.eq.s32.totalorder %s11, 1
      %p75 = por %p73, %p74
      %p76 = scmp.ne.s32.totalorder %s68, %s71
      %p77 = scmp.eq.s32.totalorder %s11, 0
      %p78 = por %p76, %p77
      %p79 = scmp.ne.s32.totalorder %s68, %s71
      %p80 = scmp.eq.s32.totalorder %s16, 1
      %p81 = por %p79, %p80
      %p82 = scmp.ne.s32.totalorder %s71, %s72
      %p83 = scmp.eq.s32.totalorder %s16, 0
      %p84 = por %p82, %p83
      %p85 = scmp.ne.s32.totalorder %s71, %s72
      %p86 = scmp.eq.s32.totalorder %s17, 1
      %p87 = por %p85, %p86
      %p89 = scmp.ne.s32.totalorder %s72, %s88
      %p90 = scmp.eq.s32.totalorder %s17, 0
      %p91 = por %p89, %p90
      %p92 = scmp.le.s32.totalorder 1, %s11
      %p93 = scmp.lt.s32.totalorder %s11, 3
      %p94 = pnand %p92, %p93
      %p95 = pneg %p94
      // Predicated region
      $region9: #{tpu_custom_call.1} parent=5 // pred_check
        _
      $region10: #{tpu_custom_call.1} parent=5 // pred_check_branch
        %97 = sbr.rel (%p94) target = $region12
      $region11: #{tpu_custom_call.1} parent=5 // pred_region
        %s98 = ssub.s32 %s11, 1
        // Predicated region
        $region13: #{tpu_custom_call.1} parent=11 // pred_check
          %p99 = pneg %p58
        $region14: #{tpu_custom_call.1} parent=11 // pred_check_branch
          %101 = sbr.rel (%p99) target = $region16
        $region15: #{tpu_custom_call.1} parent=11 // pred_region
          _
        $region16: #{tpu_custom_call.1} parent=11 // pred_fallthru
          _
      $region12: #{tpu_custom_call.1} parent=5 // pred_fallthru
        _
      %p102 = scmp.lt.s32.totalorder %s11, 2
      // Predicated region
      $region17: #{tpu_custom_call.1} parent=5 // pred_check
        %p103 = pneg %p102
      $region18: #{tpu_custom_call.1} parent=5 // pred_check_branch
        %105 = sbr.rel (%p103) target = $region20
      $region19: #{tpu_custom_call.1} parent=5 // pred_region
        // Predicated region
        $region21: #{tpu_custom_call.1} parent=19 // pred_check
          %p106 = pneg %p31
        $region22: #{tpu_custom_call.1} parent=19 // pred_check_branch
          %108 = sbr.rel (%p106) target = $region24
        $region23: #{tpu_custom_call.1} parent=19 // pred_region
          %s109 = smul.u32 64, %s11
          %p110 = scmp.lt.s32.totalorder %s109, 127
          %s111 = scalar_select %p110, %s109, 127
          %s112 = smul.addr %s111, 8
          %s113 = scalar_lea.vmem %s0, %s112
          %s114 = smul.u32 64, %s11
        $region24: #{tpu_custom_call.1} parent=19 // pred_fallthru
          _
      $region20: #{tpu_custom_call.1} parent=5 // pred_fallthru
        _
      %p115 = scmp.le.s32.totalorder 1, %s11
      %p116 = scmp.lt.s32.totalorder %s11, 3
      %p117 = pnand %p115, %p116
      %p118 = pneg %p117
      // Predicated region
      $region25: #{tpu_custom_call.1} parent=5 // pred_check
        _
      $region26: #{tpu_custom_call.1} parent=5 // pred_check_branch
        %120 = sbr.rel (%p117) target = $region28
      $region27: #{tpu_custom_call.1} parent=5 // pred_region
        %s121 = ssub.s32 %s11, 1
        %s122 = smul.u32 64, %s16
        %p123 = scmp.lt.s32.totalorder %s122, 127
        %s124 = scalar_select %p123, %s122, 127
        %s125 = smul.addr %s124, 8
        %s126 = scalar_lea.vmem %s0, %s125
        %p127 = pneg %p37
        %p128 = pneg %p34
        %p129 = pneg %p58
        %p130 = pneg %p55
        %p131 = pneg %p84
        %p132 = pneg %p81
        %s133 = sand.u32 %s71, 1
        %s134 = scalar_lea.sflag [#allocation3], %s133
        %s135 = sand.u32 %s71, 1
        %s136 = smul.addr %s135, 16
        %s137 = scalar_lea.vmem [#allocation2], %s136
        %s138 = smul.u32 64, %s16
        %p139 = scmp.lt.s32.totalorder %s138, 127
        %s140 = scalar_select %p139, %s138, 127
        %s141 = smul.addr %s140, 8
        %s142 = scalar_lea.vmem %s0, %s141
        %s143 = smul.u32 64, %s16
        %s144 = smul.u32 4, %s16
        %v145 = vld [vmem:[%s142] sm:$0xff]
        %v146 = vld [vmem:[%s142 + $0x8] sm:$0xff]
        %v147 = vld [vmem:[%s142 + $0x10] sm:$0xff]
        %v148 = vld [vmem:[%s142 + $0x18] sm:$0xff]
        %v149 = vld [vmem:[%s142 + $0x20] sm:$0xff]
        %v150 = vld [vmem:[%s142 + $0x28] sm:$0xff]
        %v151 = vld [vmem:[%s142 + $0x30] sm:$0xff]
        %v152 = vld [vmem:[%s142 + $0x38] sm:$0xff]
        %v153 = vld [vmem:[%s142 + $0x40] sm:$0xff]
        %v154 = vld [vmem:[%s142 + $0x48] sm:$0xff]
        %v155 = vld [vmem:[%s142 + $0x50] sm:$0xff]
        %v156 = vld [vmem:[%s142 + $0x58] sm:$0xff]
        %v157 = vld [vmem:[%s142 + $0x60] sm:$0xff]
        %v158 = vld [vmem:[%s142 + $0x68] sm:$0xff]
        %v159 = vld [vmem:[%s142 + $0x70] sm:$0xff]
        %v160 = vld [vmem:[%s142 + $0x78] sm:$0xff]
        %v161 = vld [vmem:[%s142 + $0x80] sm:$0xff]
        %v162 = vld [vmem:[%s142 + $0x88] sm:$0xff]
        %v163 = vld [vmem:[%s142 + $0x90] sm:$0xff]
        %v164 = vld [vmem:[%s142 + $0x98] sm:$0xff]
        %v165 = vld [vmem:[%s142 + $0xa0] sm:$0xff]
        %v166 = vld [vmem:[%s142 + $0xa8] sm:$0xff]
        %v167 = vld [vmem:[%s142 + $0xb0] sm:$0xff]
        %v168 = vld [vmem:[%s142 + $0xb8] sm:$0xff]
        %v169 = vld [vmem:[%s142 + $0xc0] sm:$0xff]
        %v170 = vld [vmem:[%s142 + $0xc8] sm:$0xff]
        %v171 = vld [vmem:[%s142 + $0xd0] sm:$0xff]
        %v172 = vld [vmem:[%s142 + $0xd8] sm:$0xff]
        %v173 = vld [vmem:[%s142 + $0xe0] sm:$0xff]
        %v174 = vld [vmem:[%s142 + $0xe8] sm:$0xff]
        %v175 = vld [vmem:[%s142 + $0xf0] sm:$0xff]
        %v176 = vld [vmem:[%s142 + $0xf8] sm:$0xff]
        %v177 = vld [vmem:[%s142 + $0x100] sm:$0xff]
        %v178 = vld [vmem:[%s142 + $0x108] sm:$0xff]
        %v179 = vld [vmem:[%s142 + $0x110] sm:$0xff]
        %v180 = vld [vmem:[%s142 + $0x118] sm:$0xff]
        %v181 = vld [vmem:[%s142 + $0x120] sm:$0xff]
        %v182 = vld [vmem:[%s142 + $0x128] sm:$0xff]
        %v183 = vld [vmem:[%s142 + $0x130] sm:$0xff]
        %v184 = vld [vmem:[%s142 + $0x138] sm:$0xff]
        %v185 = vld [vmem:[%s142 + $0x140] sm:$0xff]
        %v186 = vld [vmem:[%s142 + $0x148] sm:$0xff]
        %v187 = vld [vmem:[%s142 + $0x150] sm:$0xff]
        %v188 = vld [vmem:[%s142 + $0x158] sm:$0xff]
        %v189 = vld [vmem:[%s142 + $0x160] sm:$0xff]
        %v190 = vld [vmem:[%s142 + $0x168] sm:$0xff]
        %v191 = vld [vmem:[%s142 + $0x170] sm:$0xff]
        %v192 = vld [vmem:[%s142 + $0x178] sm:$0xff]
        %v193 = vld [vmem:[%s142 + $0x180] sm:$0xff]
        %v194 = vld [vmem:[%s142 + $0x188] sm:$0xff]
        %v195 = vld [vmem:[%s142 + $0x190] sm:$0xff]
        %v196 = vld [vmem:[%s142 + $0x198] sm:$0xff]
        %v197 = vld [vmem:[%s142 + $0x1a0] sm:$0xff]
        %v198 = vld [vmem:[%s142 + $0x1a8] sm:$0xff]
        %v199 = vld [vmem:[%s142 + $0x1b0] sm:$0xff]
        %v200 = vld [vmem:[%s142 + $0x1b8] sm:$0xff]
        %v201 = vld [vmem:[%s142 + $0x1c0] sm:$0xff]
        %v202 = vld [vmem:[%s142 + $0x1c8] sm:$0xff]
        %v203 = vld [vmem:[%s142 + $0x1d0] sm:$0xff]
        %v204 = vld [vmem:[%s142 + $0x1d8] sm:$0xff]
        %v205 = vld [vmem:[%s142 + $0x1e0] sm:$0xff]
        %v206 = vld [vmem:[%s142 + $0x1e8] sm:$0xff]
        %v207 = vld [vmem:[%s142 + $0x1f0] sm:$0xff]
        %v208 = vld [vmem:[%s142 + $0x1f8] sm:$0xff]
        %v209 = vld [vmem:[%s1] sm:$0xff]
        %v210 = vld [vmem:[%s1 + $0x8] sm:$0xff]
        %v211 = vld [vmem:[%s1 + $0x10] sm:$0xff]
        %v212 = vld [vmem:[%s1 + $0x18] sm:$0xff]
        %v213 = vld [vmem:[%s1] sm:$0xf]
        %215 = vset.pattern.permute.xlu0 112
        %216 = vperm.xlu0 %215, %v209
        %v217 = vpop.permute.xlu0 %216
        %220 = vset.pattern.permute.xlu0 112
        %221 = vperm.xlu0 %220, %v210
        %v222 = vpop.permute.xlu0 %221
        %225 = vset.pattern.permute.xlu0 112
        %226 = vperm.xlu0 %225, %v211
        %v227 = vpop.permute.xlu0 %226
        %230 = vset.pattern.permute.xlu0 112
        %231 = vperm.xlu0 %230, %v212
        %v232 = vpop.permute.xlu0 %231
        %vm234 = vcmask 130048
        %v235 = vsel %vm234, %v209, 0
        %v237 = vsel %vm234, %v210, 0
        %v239 = vsel %vm234, %v211, 0
        %v241 = vsel %vm234, %v212, 0
        %v244 = vsel %vm234, %v145, 0
        %v247 = vsel %vm234, %v146, 0
        %v250 = vsel %vm234, %v147, 0
        %v253 = vsel %vm234, %v148, 0
        %v256 = vsel %vm234, %v149, 0
        %v259 = vsel %vm234, %v150, 0
        %v262 = vsel %vm234, %v151, 0
        %v265 = vsel %vm234, %v152, 0
        %v268 = vsel %vm234, %v153, 0
        %v271 = vsel %vm234, %v154, 0
        %v274 = vsel %vm234, %v155, 0
        %v277 = vsel %vm234, %v156, 0
        %v280 = vsel %vm234, %v157, 0
        %v283 = vsel %vm234, %v158, 0
        %v286 = vsel %vm234, %v159, 0
        %v289 = vsel %vm234, %v160, 0
        %v292 = vsel %vm234, %v161, 0
        %v295 = vsel %vm234, %v162, 0
        %v298 = vsel %vm234, %v163, 0
        %v301 = vsel %vm234, %v164, 0
        %v304 = vsel %vm234, %v165, 0
        %v307 = vsel %vm234, %v166, 0
        %v310 = vsel %vm234, %v167, 0
        %v313 = vsel %vm234, %v168, 0
        %v316 = vsel %vm234, %v169, 0
        %v319 = vsel %vm234, %v170, 0
        %v322 = vsel %vm234, %v171, 0
        %v325 = vsel %vm234, %v172, 0
        %v328 = vsel %vm234, %v173, 0
        %v331 = vsel %vm234, %v174, 0
        %v334 = vsel %vm234, %v175, 0
        %v337 = vsel %vm234, %v176, 0
        %v340 = vsel %vm234, %v177, 0
        %v343 = vsel %vm234, %v178, 0
        %v346 = vsel %vm234, %v179, 0
        %v349 = vsel %vm234, %v180, 0
        %v352 = vsel %vm234, %v181, 0
        %v355 = vsel %vm234, %v182, 0
        %v358 = vsel %vm234, %v183, 0
        %v361 = vsel %vm234, %v184, 0
        %v364 = vsel %vm234, %v185, 0
        %v367 = vsel %vm234, %v186, 0
        %v370 = vsel %vm234, %v187, 0
        %v373 = vsel %vm234, %v188, 0
        %v376 = vsel %vm234, %v189, 0
        %v379 = vsel %vm234, %v190, 0
        %v382 = vsel %vm234, %v191, 0
        %v385 = vsel %vm234, %v192, 0
        %v388 = vsel %vm234, %v193, 0
        %v391 = vsel %vm234, %v194, 0
        %v394 = vsel %vm234, %v195, 0
        %v397 = vsel %vm234, %v196, 0
        %v400 = vsel %vm234, %v197, 0
        %v403 = vsel %vm234, %v198, 0
        %v406 = vsel %vm234, %v199, 0
        %v409 = vsel %vm234, %v200, 0
        %v412 = vsel %vm234, %v201, 0
        %v415 = vsel %vm234, %v202, 0
        %v418 = vsel %vm234, %v203, 0
        %v421 = vsel %vm234, %v204, 0
        %v424 = vsel %vm234, %v205, 0
        %v427 = vsel %vm234, %v206, 0
        %v430 = vsel %vm234, %v207, 0
        %v433 = vsel %vm234, %v208, 0
        %435 = vmatprep.subr.mxu0 0.0
        %436 = vmatpush1.xpose.msra.mxu0 %v244
        %437 = vmatprep.subr.mxu0 0.0
        %438 = vmatpush1.xpose.msra.mxu0 %v247
        %439 = vmatprep.subr.mxu0 0.0
        %440 = vmatpush1.xpose.msra.mxu0 %v250
        %441 = vmatprep.subr.mxu0 0.0
        %442 = vmatpush1.xpose.msra.mxu0 %v253
        %443 = vmatprep.subr.mxu0 0.0
        %444 = vmatpush1.xpose.msra.mxu0 %v256
        %445 = vmatprep.subr.mxu0 0.0
        %446 = vmatpush1.xpose.msra.mxu0 %v259
        %447 = vmatprep.subr.mxu0 0.0
        %448 = vmatpush1.xpose.msra.mxu0 %v262
        %449 = vmatprep.subr.mxu0 0.0
        %450 = vmatpush1.xpose.msra.mxu0 %v265
        %451 = vmatprep.subr.mxu0 0.0
        %452 = vmatpush1.xpose.msra.mxu0 %v268
        %453 = vmatprep.subr.mxu0 0.0
        %454 = vmatpush1.xpose.msra.mxu0 %v271
        %455 = vmatprep.subr.mxu0 0.0
        %456 = vmatpush1.xpose.msra.mxu0 %v274
        %457 = vmatprep.subr.mxu0 0.0
        %458 = vmatpush1.xpose.msra.mxu0 %v277
        %459 = vmatprep.subr.mxu0 0.0
        %460 = vmatpush1.xpose.msra.mxu0 %v280
        %461 = vmatprep.subr.mxu0 0.0
        %462 = vmatpush1.xpose.msra.mxu0 %v283
        %463 = vmatprep.subr.mxu0 0.0
        %464 = vmatpush1.xpose.msra.mxu0 %v286
        %465 = vmatprep.subr.mxu0 0.0
        %466 = vmatpush1.xpose.msra.mxu0 %v289
        %467 = vmatprep.subr.mxu0 0.0
        %468 = vmatpush1.xpose.msra.mxu0 %v292
        %469 = vmatprep.subr.mxu0 0.0
        %470 = vmatpush1.xpose.msra.mxu0 %v295
        %471 = vmatprep.subr.mxu0 0.0
        %472 = vmatpush1.xpose.msra.mxu0 %v298
        %473 = vmatprep.subr.mxu0 0.0
        %474 = vmatpush1.xpose.msra.mxu0 %v301
        %475 = vmatprep.subr.mxu0 0.0
        %476 = vmatpush1.xpose.msra.mxu0 %v304
        %477 = vmatprep.subr.mxu0 0.0
        %478 = vmatpush1.xpose.msra.mxu0 %v307
        %479 = vmatprep.subr.mxu0 0.0
        %480 = vmatpush1.xpose.msra.mxu0 %v310
        %481 = vmatprep.subr.mxu0 0.0
        %482 = vmatpush1.xpose.msra.mxu0 %v313
        %483 = vmatprep.subr.mxu0 0.0
        %484 = vmatpush1.xpose.msra.mxu0 %v316
        %485 = vmatprep.subr.mxu0 0.0
        %486 = vmatpush1.xpose.msra.mxu0 %v319
        %487 = vmatprep.subr.mxu0 0.0
        %488 = vmatpush1.xpose.msra.mxu0 %v322
        %489 = vmatprep.subr.mxu0 0.0
        %490 = vmatpush1.xpose.msra.mxu0 %v325
        %491 = vmatprep.subr.mxu0 0.0
        %492 = vmatpush1.xpose.msra.mxu0 %v328
        %493 = vmatprep.subr.mxu0 0.0
        %494 = vmatpush1.xpose.msra.mxu0 %v331
        %495 = vmatprep.subr.mxu0 0.0
        %496 = vmatpush1.xpose.msra.mxu0 %v334
        %497 = vmatprep.subr.mxu0 0.0
        %498 = vmatpush1.xpose.msra.mxu0 %v337
        %499 = vmatprep.mubr.f32.mxu0 0.0
        %500 = vmatmul.mubr.f32.gmra.mrb[0].mxu0 %v235
        %v501 = vpop.f32.mrb[0].mxu0
        %v502 = vadd.f32 %v217, %v501
        %v503 = vpop.f32.mrb[0].mxu0
        %v504 = vadd.f32 %v217, %v503
        %505 = vmatprep.mubr.f32.mxu0 0.0
        %506 = vmatmul.mubr.f32.gmra.mrb[0].mxu0 %v237
        %v507 = vpop.f32.mrb[0].mxu0
        %v508 = vadd.f32 %v222, %v507
        %v509 = vpop.f32.mrb[0].mxu0
        %v510 = vadd.f32 %v222, %v509
        %511 = vmatprep.mubr.f32.mxu0 0.0
        %512 = vmatmul.mubr.f32.gmra.mrb[0].mxu0 %v239
        %v513 = vpop.f32.mrb[0].mxu0
        %v514 = vadd.f32 %v227, %v513
        %v515 = vpop.f32.mrb[0].mxu0
        %v516 = vadd.f32 %v227, %v515
        %517 = vmatprep.mubr.f32.mxu0 0.0
        %518 = vmatmul.mubr.f32.gmra.mrb[0].mxu0 %v241
        %v519 = vpop.f32.mrb[0].mxu0
        %v520 = vadd.f32 %v232, %v519
        %v521 = vpop.f32.mrb[0].mxu0
        %v522 = vadd.f32 %v232, %v521
        %523 = vdwg.mxu0
        %524 = vmatprep.subr.mxu0 0.0
        %525 = vmatpush1.xpose.msra.mxu0 %v340
        %526 = vmatprep.subr.mxu0 0.0
        %527 = vmatpush1.xpose.msra.mxu0 %v343
        %528 = vmatprep.subr.mxu0 0.0
        %529 = vmatpush1.xpose.msra.mxu0 %v346
        %530 = vmatprep.subr.mxu0 0.0
        %531 = vmatpush1.xpose.msra.mxu0 %v349
        %532 = vmatprep.subr.mxu0 0.0
        %533 = vmatpush1.xpose.msra.mxu0 %v352
        %534 = vmatprep.subr.mxu0 0.0
        %535 = vmatpush1.xpose.msra.mxu0 %v355
        %536 = vmatprep.subr.mxu0 0.0
        %537 = vmatpush1.xpose.msra.mxu0 %v358
        %538 = vmatprep.subr.mxu0 0.0
        %539 = vmatpush1.xpose.msra.mxu0 %v361
        %540 = vmatprep.subr.mxu0 0.0
        %541 = vmatpush1.xpose.msra.mxu0 %v364
        %542 = vmatprep.subr.mxu0 0.0
        %543 = vmatpush1.xpose.msra.mxu0 %v367
        %544 = vmatprep.subr.mxu0 0.0
        %545 = vmatpush1.xpose.msra.mxu0 %v370
        %546 = vmatprep.subr.mxu0 0.0
        %547 = vmatpush1.xpose.msra.mxu0 %v373
        %548 = vmatprep.subr.mxu0 0.0
        %549 = vmatpush1.xpose.msra.mxu0 %v376
        %550 = vmatprep.subr.mxu0 0.0
        %551 = vmatpush1.xpose.msra.mxu0 %v379
        %552 = vmatprep.subr.mxu0 0.0
        %553 = vmatpush1.xpose.msra.mxu0 %v382
        %554 = vmatprep.subr.mxu0 0.0
        %555 = vmatpush1.xpose.msra.mxu0 %v385
        %556 = vmatprep.subr.mxu0 0.0
        %557 = vmatpush1.xpose.msra.mxu0 %v388
        %558 = vmatprep.subr.mxu0 0.0
        %559 = vmatpush1.xpose.msra.mxu0 %v391
        %560 = vmatprep.subr.mxu0 0.0
        %561 = vmatpush1.xpose.msra.mxu0 %v394
        %562 = vmatprep.subr.mxu0 0.0
        %563 = vmatpush1.xpose.msra.mxu0 %v397
        %564 = vmatprep.subr.mxu0 0.0
        %565 = vmatpush1.xpose.msra.mxu0 %v400
        %566 = vmatprep.subr.mxu0 0.0
        %567 = vmatpush1.xpose.msra.mxu0 %v403
        %568 = vmatprep.subr.mxu0 0.0
        %569 = vmatpush1.xpose.msra.mxu0 %v406
        %570 = vmatprep.subr.mxu0 0.0
        %571 = vmatpush1.xpose.msra.mxu0 %v409
        %572 = vmatprep.subr.mxu0 0.0
        %573 = vmatpush1.xpose.msra.mxu0 %v412
        %574 = vmatprep.subr.mxu0 0.0
        %575 = vmatpush1.xpose.msra.mxu0 %v415
        %576 = vmatprep.subr.mxu0 0.0
        %577 = vmatpush1.xpose.msra.mxu0 %v418
        %578 = vmatprep.subr.mxu0 0.0
        %579 = vmatpush1.xpose.msra.mxu0 %v421
        %580 = vmatprep.subr.mxu0 0.0
        %581 = vmatpush1.xpose.msra.mxu0 %v424
        %582 = vmatprep.subr.mxu0 0.0
        %583 = vmatpush1.xpose.msra.mxu0 %v427
        %584 = vmatprep.subr.mxu0 0.0
        %585 = vmatpush1.xpose.msra.mxu0 %v430
        %586 = vmatprep.subr.mxu0 0.0
        %587 = vmatpush1.xpose.msra.mxu0 %v433
        %588 = vmatprep.mubr.f32.mxu0 0.0
        %589 = vmatmul.mubr.f32.gmra.mrb[0].mxu0 %v235
        %v590 = vpop.f32.mrb[0].mxu0
        %v591 = vadd.f32 %v217, %v590
        %v592 = vpop.f32.mrb[0].mxu0
        %v593 = vadd.f32 %v217, %v592
        %594 = vmatprep.mubr.f32.mxu0 0.0
        %595 = vmatmul.mubr.f32.gmra.mrb[0].mxu0 %v237
        %v596 = vpop.f32.mrb[0].mxu0
        %v597 = vadd.f32 %v222, %v596
        %v598 = vpop.f32.mrb[0].mxu0
        %v599 = vadd.f32 %v222, %v598
        %600 = vmatprep.mubr.f32.mxu0 0.0
        %601 = vmatmul.mubr.f32.gmra.mrb[0].mxu0 %v239
        %v602 = vpop.f32.mrb[0].mxu0
        %v603 = vadd.f32 %v227, %v602
        %v604 = vpop.f32.mrb[0].mxu0
        %v605 = vadd.f32 %v227, %v604
        %606 = vmatprep.mubr.f32.mxu0 0.0
        %607 = vmatmul.mubr.f32.gmra.mrb[0].mxu0 %v241
        %v608 = vpop.f32.mrb[0].mxu0
        %v609 = vadd.f32 %v232, %v608
        %v610 = vpop.f32.mrb[0].mxu0
        %v611 = vadd.f32 %v232, %v610
        %612 = vdwg.mxu0
        %v613 = vtanh.pop %v502
        %v614 = vtanh.pop %v504
        %v615 = vtanh.pop %v591
        %v616 = vtanh.pop %v593
        %v617 = vtanh.pop %v508
        %v618 = vtanh.pop %v510
        %v619 = vtanh.pop %v597
        %v620 = vtanh.pop %v599
        %v621 = vtanh.pop %v514
        %v622 = vtanh.pop %v516
        %v623 = vtanh.pop %v603
        %v624 = vtanh.pop %v605
        %v625 = vtanh.pop %v520
        %v626 = vtanh.pop %v522
        %v627 = vtanh.pop %v609
        %v628 = vtanh.pop %v611
        %629 = vset.pattern.permute.xlu0 113
        %630 = vperm.xlu0 %629, %v209
        %v631 = vpop.permute.xlu0 %630
        %633 = vset.pattern.permute.xlu0 113
        %634 = vperm.xlu0 %633, %v210
        %v635 = vpop.permute.xlu0 %634
        %637 = vset.pattern.permute.xlu0 113
        %638 = vperm.xlu0 %637, %v211
        %v639 = vpop.permute.xlu0 %638
        %641 = vset.pattern.permute.xlu0 113
        %642 = vperm.xlu0 %641, %v212
        %v643 = vpop.permute.xlu0 %642
        %645 = vrot.lane.b32.xlu0 %v209, 112
        %v646 = vpop.permute.xlu0 %645
        %647 = vrot.lane.b32.xlu0 %v210, 112
        %v648 = vpop.permute.xlu0 %647
        %649 = vrot.lane.b32.xlu0 %v211, 112
        %v650 = vpop.permute.xlu0 %649
        %651 = vrot.lane.b32.xlu0 %v212, 112
        %v652 = vpop.permute.xlu0 %651
        %vm653 = vcmask 261120
        %v654 = vsel %vm653, %v646, 0
        %v656 = vsel %vm653, %v648, 0
        %v658 = vsel %vm653, %v650, 0
        %v660 = vsel %vm653, %v652, 0
        %662 = vmatprep.subr.mxu0 %v614
        %663 = vmatpush1.msra.mxu0 %v613
        %664 = vmatprep.subr.mxu0 %v618
        %665 = vmatpush1.msra.mxu0 %v617
        %666 = vmatprep.subr.mxu0 %v622
        %667 = vmatpush1.msra.mxu0 %v621
        %668 = vmatprep.subr.mxu0 %v626
        %669 = vmatpush1.msra.mxu0 %v625
        %670 = vmatprep.subr.mxu0 0.0
        %671 = vmatpush1.msra.mxu0 0.0
        %672 = vmatprep.subr.mxu0 0.0
        %673 = vmatpush1.msra.mxu0 0.0
        %674 = vmatprep.subr.mxu0 0.0
        %675 = vmatpush1.msra.mxu0 0.0
        %676 = vmatprep.subr.mxu0 0.0
        %677 = vmatpush1.msra.mxu0 0.0
        %678 = vmatprep.subr.mxu0 0.0
        %679 = vmatpush1.msra.mxu0 0.0
        %680 = vmatprep.subr.mxu0 0.0
        %681 = vmatpush1.msra.mxu0 0.0
        %682 = vmatprep.subr.mxu0 0.0
        %683 = vmatpush1.msra.mxu0 0.0
        %684 = vmatprep.subr.mxu0 0.0
        %685 = vmatpush1.msra.mxu0 0.0
        %686 = vmatprep.subr.mxu0 0.0
        %687 = vmatpush1.msra.mxu0 0.0
        %688 = vmatprep.subr.mxu0 0.0
        %689 = vmatpush1.msra.mxu0 0.0
        %690 = vmatprep.subr.mxu0 0.0
        %691 = vmatpush1.msra.mxu0 0.0
        %692 = vmatprep.subr.mxu0 0.0
        %693 = vmatpush1.msra.mxu0 0.0
        %694 = vmatprep.subr.mxu0 0.0
        %695 = vmatpush1.msra.mxu0 0.0
        %696 = vmatprep.subr.mxu0 0.0
        %697 = vmatpush1.msra.mxu0 0.0
        %698 = vmatprep.subr.mxu0 0.0
        %699 = vmatpush1.msra.mxu0 0.0
        %700 = vmatprep.subr.mxu0 0.0
        %701 = vmatpush1.msra.mxu0 0.0
        %702 = vmatprep.subr.mxu0 0.0
        %703 = vmatpush1.msra.mxu0 0.0
        %704 = vmatprep.subr.mxu0 0.0
        %705 = vmatpush1.msra.mxu0 0.0
        %706 = vmatprep.subr.mxu0 0.0
        %707 = vmatpush1.msra.mxu0 0.0
        %708 = vmatprep.subr.mxu0 0.0
        %709 = vmatpush1.msra.mxu0 0.0
        %710 = vmatprep.subr.mxu0 0.0
        %711 = vmatpush1.msra.mxu0 0.0
        %712 = vmatprep.subr.mxu0 0.0
        %713 = vmatpush1.msra.mxu0 0.0
        %714 = vmatprep.subr.mxu0 0.0
        %715 = vmatpush1.msra.mxu0 0.0
        %716 = vmatprep.subr.mxu0 0.0
        %717 = vmatpush1.msra.mxu0 0.0
        %718 = vmatprep.subr.mxu0 0.0
        %719 = vmatpush1.msra.mxu0 0.0
        %720 = vmatprep.subr.mxu0 0.0
        %721 = vmatpush1.msra.mxu0 0.0
        %722 = vmatprep.subr.mxu0 0.0
        %723 = vmatpush1.msra.mxu0 0.0
        %724 = vmatprep.subr.mxu0 0.0
        %725 = vmatpush1.msra.mxu0 0.0
        %726 = vmatprep.mubr.f32.mxu0 0.0
        %727 = vmatmul.mubr.f32.gmra.mrb[0].mxu0 %v654
        %v728 = vpop.f32.mrb[0].mxu0
        %v729 = vadd.f32 %v631, %v728
        %v730 = vpop.f32.mrb[0].mxu0
        %v731 = vadd.f32 %v631, %v730
        %732 = vmatprep.mubr.f32.mxu0 0.0
        %733 = vmatmul.mubr.f32.gmra.mrb[0].mxu0 %v656
        %v734 = vpop.f32.mrb[0].mxu0
        %v735 = vadd.f32 %v635, %v734
        %v736 = vpop.f32.mrb[0].mxu0
        %v737 = vadd.f32 %v635, %v736
        %738 = vmatprep.mubr.f32.mxu0 0.0
        %739 = vmatmul.mubr.f32.gmra.mrb[0].mxu0 %v658
        %v740 = vpop.f32.mrb[0].mxu0
        %v741 = vadd.f32 %v639, %v740
        %v742 = vpop.f32.mrb[0].mxu0
        %v743 = vadd.f32 %v639, %v742
        %744 = vmatprep.mubr.f32.mxu0 0.0
        %745 = vmatmul.mubr.f32.gmra.mrb[0].mxu0 %v660
        %v746 = vpop.f32.mrb[0].mxu0
        %v747 = vadd.f32 %v643, %v746
        %v748 = vpop.f32.mrb[0].mxu0
        %v749 = vadd.f32 %v643, %v748
        %750 = vdwg.mxu0
        %751 = vmatprep.subr.mxu0 %v616
        %752 = vmatpush1.msra.mxu0 %v615
        %753 = vmatprep.subr.mxu0 %v620
        %754 = vmatpush1.msra.mxu0 %v619
        %755 = vmatprep.subr.mxu0 %v624
        %756 = vmatpush1.msra.mxu0 %v623
        %757 = vmatprep.subr.mxu0 %v628
        %758 = vmatpush1.msra.mxu0 %v627
        %759 = vmatprep.subr.mxu0 0.0
        %760 = vmatpush1.msra.mxu0 0.0
        %761 = vmatprep.subr.mxu0 0.0
        %762 = vmatpush1.msra.mxu0 0.0
        %763 = vmatprep.subr.mxu0 0.0
        %764 = vmatpush1.msra.mxu0 0.0
        %765 = vmatprep.subr.mxu0 0.0
        %766 = vmatpush1.msra.mxu0 0.0
        %767 = vmatprep.subr.mxu0 0.0
        %768 = vmatpush1.msra.mxu0 0.0
        %769 = vmatprep.subr.mxu0 0.0
        %770 = vmatpush1.msra.mxu0 0.0
        %771 = vmatprep.subr.mxu0 0.0
        %772 = vmatpush1.msra.mxu0 0.0
        %773 = vmatprep.subr.mxu0 0.0
        %774 = vmatpush1.msra.mxu0 0.0
        %775 = vmatprep.subr.mxu0 0.0
        %776 = vmatpush1.msra.mxu0 0.0
        %777 = vmatprep.subr.mxu0 0.0
        %778 = vmatpush1.msra.mxu0 0.0
        %779 = vmatprep.subr.mxu0 0.0
        %780 = vmatpush1.msra.mxu0 0.0
        %781 = vmatprep.subr.mxu0 0.0
        %782 = vmatpush1.msra.mxu0 0.0
        %783 = vmatprep.subr.mxu0 0.0
        %784 = vmatpush1.msra.mxu0 0.0
        %785 = vmatprep.subr.mxu0 0.0
        %786 = vmatpush1.msra.mxu0 0.0
        %787 = vmatprep.subr.mxu0 0.0
        %788 = vmatpush1.msra.mxu0 0.0
        %789 = vmatprep.subr.mxu0 0.0
        %790 = vmatpush1.msra.mxu0 0.0
        %791 = vmatprep.subr.mxu0 0.0
        %792 = vmatpush1.msra.mxu0 0.0
        %793 = vmatprep.subr.mxu0 0.0
        %794 = vmatpush1.msra.mxu0 0.0
        %795 = vmatprep.subr.mxu0 0.0
        %796 = vmatpush1.msra.mxu0 0.0
        %797 = vmatprep.subr.mxu0 0.0
        %798 = vmatpush1.msra.mxu0 0.0
        %799 = vmatprep.subr.mxu0 0.0
        %800 = vmatpush1.msra.mxu0 0.0
        %801 = vmatprep.subr.mxu0 0.0
        %802 = vmatpush1.msra.mxu0 0.0
        %803 = vmatprep.subr.mxu0 0.0
        %804 = vmatpush1.msra.mxu0 0.0
        %805 = vmatprep.subr.mxu0 0.0
        %806 = vmatpush1.msra.mxu0 0.0
        %807 = vmatprep.subr.mxu0 0.0
        %808 = vmatpush1.msra.mxu0 0.0
        %809 = vmatprep.subr.mxu0 0.0
        %810 = vmatpush1.msra.mxu0 0.0
        %811 = vmatprep.subr.mxu0 0.0
        %812 = vmatpush1.msra.mxu0 0.0
        %813 = vmatprep.subr.mxu0 0.0
        %814 = vmatpush1.msra.mxu0 0.0
        %815 = vmatprep.mubr.f32.mxu0 0.0
        %816 = vmatmul.mubr.f32.gmra.mrb[0].mxu0 %v654
        %v817 = vpop.f32.mrb[0].mxu0
        %v818 = vadd.f32 %v631, %v817
        %v819 = vpop.f32.mrb[0].mxu0
        %v820 = vadd.f32 %v631, %v819
        %821 = vmatprep.mubr.f32.mxu0 0.0
        %822 = vmatmul.mubr.f32.gmra.mrb[0].mxu0 %v656
        %v823 = vpop.f32.mrb[0].mxu0
        %v824 = vadd.f32 %v635, %v823
        %v825 = vpop.f32.mrb[0].mxu0
        %v826 = vadd.f32 %v635, %v825
        %827 = vmatprep.mubr.f32.mxu0 0.0
        %828 = vmatmul.mubr.f32.gmra.mrb[0].mxu0 %v658
        %v829 = vpop.f32.mrb[0].mxu0
        %v830 = vadd.f32 %v639, %v829
        %v831 = vpop.f32.mrb[0].mxu0
        %v832 = vadd.f32 %v639, %v831
        %833 = vmatprep.mubr.f32.mxu0 0.0
        %834 = vmatmul.mubr.f32.gmra.mrb[0].mxu0 %v660
        %v835 = vpop.f32.mrb[0].mxu0
        %v836 = vadd.f32 %v643, %v835
        %v837 = vpop.f32.mrb[0].mxu0
        %v838 = vadd.f32 %v643, %v837
        %839 = vdwg.mxu0
        %v840 = vtanh.pop %v729
        %v841 = vtanh.pop %v731
        %v842 = vtanh.pop %v818
        %v843 = vtanh.pop %v820
        %v844 = vtanh.pop %v735
        %v845 = vtanh.pop %v737
        %v846 = vtanh.pop %v824
        %v847 = vtanh.pop %v826
        %v848 = vtanh.pop %v741
        %v849 = vtanh.pop %v743
        %v850 = vtanh.pop %v830
        %v851 = vtanh.pop %v832
        %v852 = vtanh.pop %v747
        %v853 = vtanh.pop %v749
        %v854 = vtanh.pop %v836
        %v855 = vtanh.pop %v838
        %856 = vset.pattern.permute.xlu0 114
        %857 = vperm.xlu0 %856, %v209
        %v858 = vpop.permute.xlu0 %857
        %860 = vset.pattern.permute.xlu0 114
        %861 = vperm.xlu0 %860, %v210
        %v862 = vpop.permute.xlu0 %861
        %864 = vset.pattern.permute.xlu0 114
        %865 = vperm.xlu0 %864, %v211
        %v866 = vpop.permute.xlu0 %865
        %868 = vset.pattern.permute.xlu0 114
        %869 = vperm.xlu0 %868, %v212
        %v870 = vpop.permute.xlu0 %869
        %872 = vrot.lane.b32.xlu0 %v209, 80
        %v873 = vpop.permute.xlu0 %872
        %874 = vrot.lane.b32.xlu0 %v210, 80
        %v875 = vpop.permute.xlu0 %874
        %876 = vrot.lane.b32.xlu0 %v211, 80
        %v877 = vpop.permute.xlu0 %876
        %878 = vrot.lane.b32.xlu0 %v212, 80
        %v879 = vpop.permute.xlu0 %878
        %v880 = vsel %vm653, %v873, 0
        %v882 = vsel %vm653, %v875, 0
        %v884 = vsel %vm653, %v877, 0
        %v886 = vsel %vm653, %v879, 0
        %888 = vmatprep.subr.mxu0 %v841
        %889 = vmatpush1.msra.mxu0 %v840
        %890 = vmatprep.subr.mxu0 %v845
        %891 = vmatpush1.msra.mxu0 %v844
        %892 = vmatprep.subr.mxu0 %v849
        %893 = vmatpush1.msra.mxu0 %v848
        %894 = vmatprep.subr.mxu0 %v853
        %895 = vmatpush1.msra.mxu0 %v852
        %896 = vmatprep.subr.mxu0 0.0
        %897 = vmatpush1.msra.mxu0 0.0
        %898 = vmatprep.subr.mxu0 0.0
        %899 = vmatpush1.msra.mxu0 0.0
        %900 = vmatprep.subr.mxu0 0.0
        %901 = vmatpush1.msra.mxu0 0.0
        %902 = vmatprep.subr.mxu0 0.0
        %903 = vmatpush1.msra.mxu0 0.0
        %904 = vmatprep.subr.mxu0 0.0
        %905 = vmatpush1.msra.mxu0 0.0
        %906 = vmatprep.subr.mxu0 0.0
        %907 = vmatpush1.msra.mxu0 0.0
        %908 = vmatprep.subr.mxu0 0.0
        %909 = vmatpush1.msra.mxu0 0.0
        %910 = vmatprep.subr.mxu0 0.0
        %911 = vmatpush1.msra.mxu0 0.0
        %912 = vmatprep.subr.mxu0 0.0
        %913 = vmatpush1.msra.mxu0 0.0
        %914 = vmatprep.subr.mxu0 0.0
        %915 = vmatpush1.msra.mxu0 0.0
        %916 = vmatprep.subr.mxu0 0.0
        %917 = vmatpush1.msra.mxu0 0.0
        %918 = vmatprep.subr.mxu0 0.0
        %919 = vmatpush1.msra.mxu0 0.0
        %920 = vmatprep.subr.mxu0 0.0
        %921 = vmatpush1.msra.mxu0 0.0
        %922 = vmatprep.subr.mxu0 0.0
        %923 = vmatpush1.msra.mxu0 0.0
        %924 = vmatprep.subr.mxu0 0.0
        %925 = vmatpush1.msra.mxu0 0.0
        %926 = vmatprep.subr.mxu0 0.0
        %927 = vmatpush1.msra.mxu0 0.0
        %928 = vmatprep.subr.mxu0 0.0
        %929 = vmatpush1.msra.mxu0 0.0
        %930 = vmatprep.subr.mxu0 0.0
        %931 = vmatpush1.msra.mxu0 0.0
        %932 = vmatprep.subr.mxu0 0.0
        %933 = vmatpush1.msra.mxu0 0.0
        %934 = vmatprep.subr.mxu0 0.0
        %935 = vmatpush1.msra.mxu0 0.0
        %936 = vmatprep.subr.mxu0 0.0
        %937 = vmatpush1.msra.mxu0 0.0
        %938 = vmatprep.subr.mxu0 0.0
        %939 = vmatpush1.msra.mxu0 0.0
        %940 = vmatprep.subr.mxu0 0.0
        %941 = vmatpush1.msra.mxu0 0.0
        %942 = vmatprep.subr.mxu0 0.0
        %943 = vmatpush1.msra.mxu0 0.0
        %944 = vmatprep.subr.mxu0 0.0
        %945 = vmatpush1.msra.mxu0 0.0
        %946 = vmatprep.subr.mxu0 0.0
        %947 = vmatpush1.msra.mxu0 0.0
        %948 = vmatprep.subr.mxu0 0.0
        %949 = vmatpush1.msra.mxu0 0.0
        %950 = vmatprep.subr.mxu0 0.0
        %951 = vmatpush1.msra.mxu0 0.0
        %952 = vmatprep.mubr.f32.mxu0 0.0
        %953 = vmatmul.mubr.f32.gmra.mrb[0].mxu0 %v880
        %v954 = vpop.f32.mrb[0].mxu0
        %v955 = vadd.f32 %v858, %v954
        %v956 = vpop.f32.mrb[0].mxu0
        %v957 = vadd.f32 %v858, %v956
        %958 = vmatprep.mubr.f32.mxu0 0.0
        %959 = vmatmul.mubr.f32.gmra.mrb[0].mxu0 %v882
        %v960 = vpop.f32.mrb[0].mxu0
        %v961 = vadd.f32 %v862, %v960
        %v962 = vpop.f32.mrb[0].mxu0
        %v963 = vadd.f32 %v862, %v962
        %964 = vmatprep.mubr.f32.mxu0 0.0
        %965 = vmatmul.mubr.f32.gmra.mrb[0].mxu0 %v884
        %v966 = vpop.f32.mrb[0].mxu0
        %v967 = vadd.f32 %v866, %v966
        %v968 = vpop.f32.mrb[0].mxu0
        %v969 = vadd.f32 %v866, %v968
        %970 = vmatprep.mubr.f32.mxu0 0.0
        %971 = vmatmul.mubr.f32.gmra.mrb[0].mxu0 %v886
        %v972 = vpop.f32.mrb[0].mxu0
        %v973 = vadd.f32 %v870, %v972
        %v974 = vpop.f32.mrb[0].mxu0
        %v975 = vadd.f32 %v870, %v974
        %976 = vdwg.mxu0
        %977 = vmatprep.subr.mxu0 %v843
        %978 = vmatpush1.msra.mxu0 %v842
        %979 = vmatprep.subr.mxu0 %v847
        %980 = vmatpush1.msra.mxu0 %v846
        %981 = vmatprep.subr.mxu0 %v851
        %982 = vmatpush1.msra.mxu0 %v850
        %983 = vmatprep.subr.mxu0 %v855
        %984 = vmatpush1.msra.mxu0 %v854
        %985 = vmatprep.subr.mxu0 0.0
        %986 = vmatpush1.msra.mxu0 0.0
        %987 = vmatprep.subr.mxu0 0.0
        %988 = vmatpush1.msra.mxu0 0.0
        %989 = vmatprep.subr.mxu0 0.0
        %990 = vmatpush1.msra.mxu0 0.0
        %991 = vmatprep.subr.mxu0 0.0
        %992 = vmatpush1.msra.mxu0 0.0
        %993 = vmatprep.subr.mxu0 0.0
        %994 = vmatpush1.msra.mxu0 0.0
        %995 = vmatprep.subr.mxu0 0.0
        %996 = vmatpush1.msra.mxu0 0.0
        %997 = vmatprep.subr.mxu0 0.0
        %998 = vmatpush1.msra.mxu0 0.0
        %999 = vmatprep.subr.mxu0 0.0
        %1000 = vmatpush1.msra.mxu0 0.0
        %1001 = vmatprep.subr.mxu0 0.0
        %1002 = vmatpush1.msra.mxu0 0.0
        %1003 = vmatprep.subr.mxu0 0.0
        %1004 = vmatpush1.msra.mxu0 0.0
        %1005 = vmatprep.subr.mxu0 0.0
        %1006 = vmatpush1.msra.mxu0 0.0
        %1007 = vmatprep.subr.mxu0 0.0
        %1008 = vmatpush1.msra.mxu0 0.0
        %1009 = vmatprep.subr.mxu0 0.0
        %1010 = vmatpush1.msra.mxu0 0.0
        %1011 = vmatprep.subr.mxu0 0.0
        %1012 = vmatpush1.msra.mxu0 0.0
        %1013 = vmatprep.subr.mxu0 0.0
        %1014 = vmatpush1.msra.mxu0 0.0
        %1015 = vmatprep.subr.mxu0 0.0
        %1016 = vmatpush1.msra.mxu0 0.0
        %1017 = vmatprep.subr.mxu0 0.0
        %1018 = vmatpush1.msra.mxu0 0.0
        %1019 = vmatprep.subr.mxu0 0.0
        %1020 = vmatpush1.msra.mxu0 0.0
        %1021 = vmatprep.subr.mxu0 0.0
        %1022 = vmatpush1.msra.mxu0 0.0
        %1023 = vmatprep.subr.mxu0 0.0
        %1024 = vmatpush1.msra.mxu0 0.0
        %1025 = vmatprep.subr.mxu0 0.0
        %1026 = vmatpush1.msra.mxu0 0.0
        %1027 = vmatprep.subr.mxu0 0.0
        %1028 = vmatpush1.msra.mxu0 0.0
        %1029 = vmatprep.subr.mxu0 0.0
        %1030 = vmatpush1.msra.mxu0 0.0
        %1031 = vmatprep.subr.mxu0 0.0
        %1032 = vmatpush1.msra.mxu0 0.0
        %1033 = vmatprep.subr.mxu0 0.0
        %1034 = vmatpush1.msra.mxu0 0.0
        %1035 = vmatprep.subr.mxu0 0.0
        %1036 = vmatpush1.msra.mxu0 0.0
        %1037 = vmatprep.subr.mxu0 0.0
        %1038 = vmatpush1.msra.mxu0 0.0
        %1039 = vmatprep.subr.mxu0 0.0
        %1040 = vmatpush1.msra.mxu0 0.0
        %1041 = vmatprep.mubr.f32.mxu0 0.0
        %1042 = vmatmul.mubr.f32.gmra.mrb[0].mxu0 %v880
        %v1043 = vpop.f32.mrb[0].mxu0
        %v1044 = vadd.f32 %v858, %v1043
        %v1045 = vpop.f32.mrb[0].mxu0
        %v1046 = vadd.f32 %v858, %v1045
        %1047 = vmatprep.mubr.f32.mxu0 0.0
        %1048 = vmatmul.mubr.f32.gmra.mrb[0].mxu0 %v882
        %v1049 = vpop.f32.mrb[0].mxu0
        %v1050 = vadd.f32 %v862, %v1049
        %v1051 = vpop.f32.mrb[0].mxu0
        %v1052 = vadd.f32 %v862, %v1051
        %1053 = vmatprep.mubr.f32.mxu0 0.0
        %1054 = vmatmul.mubr.f32.gmra.mrb[0].mxu0 %v884
        %v1055 = vpop.f32.mrb[0].mxu0
        %v1056 = vadd.f32 %v866, %v1055
        %v1057 = vpop.f32.mrb[0].mxu0
        %v1058 = vadd.f32 %v866, %v1057
        %1059 = vmatprep.mubr.f32.mxu0 0.0
        %1060 = vmatmul.mubr.f32.gmra.mrb[0].mxu0 %v886
        %v1061 = vpop.f32.mrb[0].mxu0
        %v1062 = vadd.f32 %v870, %v1061
        %v1063 = vpop.f32.mrb[0].mxu0
        %v1064 = vadd.f32 %v870, %v1063
        %1065 = vdwg.mxu0
        %v1066 = vtanh.pop %v955
        %v1067 = vtanh.pop %v957
        %v1068 = vtanh.pop %v1044
        %v1069 = vtanh.pop %v1046
        %v1070 = vtanh.pop %v961
        %v1071 = vtanh.pop %v963
        %v1072 = vtanh.pop %v1050
        %v1073 = vtanh.pop %v1052
        %v1074 = vtanh.pop %v967
        %v1075 = vtanh.pop %v969
        %v1076 = vtanh.pop %v1056
        %v1077 = vtanh.pop %v1058
        %v1078 = vtanh.pop %v973
        %v1079 = vtanh.pop %v975
        %v1080 = vtanh.pop %v1062
        %v1081 = vtanh.pop %v1064
        %1083 = vset.pattern.permute.xlu0 115
        %1084 = vperm.xlu0 %1083, %v213
        %v1085 = vpop.permute.xlu0 %1084
        %1087 = vrot.lane.b32.xlu0 %v213, 48
        %v1088 = vpop.permute.xlu0 %1087
        %v1089 = vsel %vm653, %v1088, 0
        %1091 = vmatprep.subr.mxu0 %v1067
        %1092 = vmatpush1.msra.mxu0 %v1066
        %1093 = vmatprep.subr.mxu0 %v1071
        %1094 = vmatpush1.msra.mxu0 %v1070
        %1095 = vmatprep.subr.mxu0 %v1075
        %1096 = vmatpush1.msra.mxu0 %v1074
        %1097 = vmatprep.subr.mxu0 %v1079
        %1098 = vmatpush1.msra.mxu0 %v1078
        %1099 = vmatprep.subr.mxu0 0.0
        %1100 = vmatpush1.msra.mxu0 0.0
        %1101 = vmatprep.subr.mxu0 0.0
        %1102 = vmatpush1.msra.mxu0 0.0
        %1103 = vmatprep.subr.mxu0 0.0
        %1104 = vmatpush1.msra.mxu0 0.0
        %1105 = vmatprep.subr.mxu0 0.0
        %1106 = vmatpush1.msra.mxu0 0.0
        %1107 = vmatprep.subr.mxu0 0.0
        %1108 = vmatpush1.msra.mxu0 0.0
        %1109 = vmatprep.subr.mxu0 0.0
        %1110 = vmatpush1.msra.mxu0 0.0
        %1111 = vmatprep.subr.mxu0 0.0
        %1112 = vmatpush1.msra.mxu0 0.0
        %1113 = vmatprep.subr.mxu0 0.0
        %1114 = vmatpush1.msra.mxu0 0.0
        %1115 = vmatprep.subr.mxu0 0.0
        %1116 = vmatpush1.msra.mxu0 0.0
        %1117 = vmatprep.subr.mxu0 0.0
        %1118 = vmatpush1.msra.mxu0 0.0
        %1119 = vmatprep.subr.mxu0 0.0
        %1120 = vmatpush1.msra.mxu0 0.0
        %1121 = vmatprep.subr.mxu0 0.0
        %1122 = vmatpush1.msra.mxu0 0.0
        %1123 = vmatprep.subr.mxu0 0.0
        %1124 = vmatpush1.msra.mxu0 0.0
        %1125 = vmatprep.subr.mxu0 0.0
        %1126 = vmatpush1.msra.mxu0 0.0
        %1127 = vmatprep.subr.mxu0 0.0
        %1128 = vmatpush1.msra.mxu0 0.0
        %1129 = vmatprep.subr.mxu0 0.0
        %1130 = vmatpush1.msra.mxu0 0.0
        %1131 = vmatprep.subr.mxu0 0.0
        %1132 = vmatpush1.msra.mxu0 0.0
        %1133 = vmatprep.subr.mxu0 0.0
        %1134 = vmatpush1.msra.mxu0 0.0
        %1135 = vmatprep.subr.mxu0 0.0
        %1136 = vmatpush1.msra.mxu0 0.0
        %1137 = vmatprep.subr.mxu0 0.0
        %1138 = vmatpush1.msra.mxu0 0.0
        %1139 = vmatprep.subr.mxu0 0.0
        %1140 = vmatpush1.msra.mxu0 0.0
        %1141 = vmatprep.subr.mxu0 0.0
        %1142 = vmatpush1.msra.mxu0 0.0
        %1143 = vmatprep.subr.mxu0 0.0
        %1144 = vmatpush1.msra.mxu0 0.0
        %1145 = vmatprep.subr.mxu0 0.0
        %1146 = vmatpush1.msra.mxu0 0.0
        %1147 = vmatprep.subr.mxu0 0.0
        %1148 = vmatpush1.msra.mxu0 0.0
        %1149 = vmatprep.subr.mxu0 0.0
        %1150 = vmatpush1.msra.mxu0 0.0
        %1151 = vmatprep.subr.mxu0 0.0
        %1152 = vmatpush1.msra.mxu0 0.0
        %1153 = vmatprep.subr.mxu0 0.0
        %1154 = vmatpush1.msra.mxu0 0.0
        %1155 = vmatprep.mubr.f32.mxu0 0.0
        %1156 = vmatmul.mubr.f32.gmra.mrb[0].mxu0 %v1089
        %v1157 = vpop.f32.mrb[0].mxu0
        %v1158 = vadd.f32 %v1085, %v1157
        %v1159 = vpop.f32.mrb[0].mxu0
        %v1160 = vadd.f32 %v1085, %v1159
        %1161 = vdwg.mxu0
        %1162 = vmatprep.subr.mxu0 %v1069
        %1163 = vmatpush1.msra.mxu0 %v1068
        %1164 = vmatprep.subr.mxu0 %v1073
        %1165 = vmatpush1.msra.mxu0 %v1072
        %1166 = vmatprep.subr.mxu0 %v1077
        %1167 = vmatpush1.msra.mxu0 %v1076
        %1168 = vmatprep.subr.mxu0 %v1081
        %1169 = vmatpush1.msra.mxu0 %v1080
        %1170 = vmatprep.subr.mxu0 0.0
        %1171 = vmatpush1.msra.mxu0 0.0
        %1172 = vmatprep.subr.mxu0 0.0
        %1173 = vmatpush1.msra.mxu0 0.0
        %1174 = vmatprep.subr.mxu0 0.0
        %1175 = vmatpush1.msra.mxu0 0.0
        %1176 = vmatprep.subr.mxu0 0.0
        %1177 = vmatpush1.msra.mxu0 0.0
        %1178 = vmatprep.subr.mxu0 0.0
        %1179 = vmatpush1.msra.mxu0 0.0
        %1180 = vmatprep.subr.mxu0 0.0
        %1181 = vmatpush1.msra.mxu0 0.0
        %1182 = vmatprep.subr.mxu0 0.0
        %1183 = vmatpush1.msra.mxu0 0.0
        %1184 = vmatprep.subr.mxu0 0.0
        %1185 = vmatpush1.msra.mxu0 0.0
        %1186 = vmatprep.subr.mxu0 0.0
        %1187 = vmatpush1.msra.mxu0 0.0
        %1188 = vmatprep.subr.mxu0 0.0
        %1189 = vmatpush1.msra.mxu0 0.0
        %1190 = vmatprep.subr.mxu0 0.0
        %1191 = vmatpush1.msra.mxu0 0.0
        %1192 = vmatprep.subr.mxu0 0.0
        %1193 = vmatpush1.msra.mxu0 0.0
        %1194 = vmatprep.subr.mxu0 0.0
        %1195 = vmatpush1.msra.mxu0 0.0
        %1196 = vmatprep.subr.mxu0 0.0
        %1197 = vmatpush1.msra.mxu0 0.0
        %1198 = vmatprep.subr.mxu0 0.0
        %1199 = vmatpush1.msra.mxu0 0.0
        %1200 = vmatprep.subr.mxu0 0.0
        %1201 = vmatpush1.msra.mxu0 0.0
        %1202 = vmatprep.subr.mxu0 0.0
        %1203 = vmatpush1.msra.mxu0 0.0
        %1204 = vmatprep.subr.mxu0 0.0
        %1205 = vmatpush1.msra.mxu0 0.0
        %1206 = vmatprep.subr.mxu0 0.0
        %1207 = vmatpush1.msra.mxu0 0.0
        %1208 = vmatprep.subr.mxu0 0.0
        %1209 = vmatpush1.msra.mxu0 0.0
        %1210 = vmatprep.subr.mxu0 0.0
        %1211 = vmatpush1.msra.mxu0 0.0
        %1212 = vmatprep.subr.mxu0 0.0
        %1213 = vmatpush1.msra.mxu0 0.0
        %1214 = vmatprep.subr.mxu0 0.0
        %1215 = vmatpush1.msra.mxu0 0.0
        %1216 = vmatprep.subr.mxu0 0.0
        %1217 = vmatpush1.msra.mxu0 0.0
        %1218 = vmatprep.subr.mxu0 0.0
        %1219 = vmatpush1.msra.mxu0 0.0
        %1220 = vmatprep.subr.mxu0 0.0
        %1221 = vmatpush1.msra.mxu0 0.0
        %1222 = vmatprep.subr.mxu0 0.0
        %1223 = vmatpush1.msra.mxu0 0.0
        %1224 = vmatprep.subr.mxu0 0.0
        %1225 = vmatpush1.msra.mxu0 0.0
        %1226 = vmatprep.mubr.f32.mxu0 0.0
        %1227 = vmatmul.mubr.f32.gmra.mrb[0].mxu0 %v1089
        %v1228 = vpop.f32.mrb[0].mxu0
        %v1229 = vadd.f32 %v1085, %v1228
        %v1230 = vpop.f32.mrb[0].mxu0
        %v1231 = vadd.f32 %v1085, %v1230
        %1232 = vdwg.mxu0
        %vm1233 = vcmask 1043456
        %v1234 = vsel %vm1233, %v1158, -inf
        %v1235 = vrot.slane %v1234, 4
        %v1236 = vmax.f32 %v1234, %v1235
        %v1237 = vrot.slane %v1236, 2
        %v1238 = vmax.f32 %v1236, %v1237
        %v1239 = vrot.slane %v1238, 1
        %v1240 = vmax.f32 %v1238, %v1239
        %v1241 = vsel %vm1233, %v1160, -inf
        %v1242 = vrot.slane %v1241, 4
        %v1243 = vmax.f32 %v1241, %v1242
        %v1244 = vrot.slane %v1243, 2
        %v1245 = vmax.f32 %v1243, %v1244
        %v1246 = vrot.slane %v1245, 1
        %v1247 = vmax.f32 %v1245, %v1246
        %v1248 = vsel %vm1233, %v1229, -inf
        %v1249 = vrot.slane %v1248, 4
        %v1250 = vmax.f32 %v1248, %v1249
        %v1251 = vrot.slane %v1250, 2
        %v1252 = vmax.f32 %v1250, %v1251
        %v1253 = vrot.slane %v1252, 1
        %v1254 = vmax.f32 %v1252, %v1253
        %v1255 = vsel %vm1233, %v1231, -inf
        %v1256 = vrot.slane %v1255, 4
        %v1257 = vmax.f32 %v1255, %v1256
        %v1258 = vrot.slane %v1257, 2
        %v1259 = vmax.f32 %v1257, %v1258
        %v1260 = vrot.slane %v1259, 1
        %v1261 = vmax.f32 %v1259, %v1260
        %v1262 = vsub.f32 %v1158, %v1240
        %v1263 = vsub.f32 %v1160, %v1247
        %v1264 = vsub.f32 %v1229, %v1254
        %v1265 = vsub.f32 %v1231, %v1261
        %v1266 = vmul.f32 %v1262, 1.442695
        %v1267 = vpow.pop %v1266
        %v1268 = vmul.f32 %v1263, 1.442695
        %v1269 = vpow.pop %v1268
        %v1270 = vmul.f32 %v1264, 1.442695
        %v1271 = vpow.pop %v1270
        %v1272 = vmul.f32 %v1265, 1.442695
        %v1273 = vpow.pop %v1272
        %v1274 = vsel %vm1233, %v1267, 0.0
        %v1275 = vrot.slane %v1274, 4
        %v1276 = vadd.f32 %v1274, %v1275
        %v1277 = vrot.slane %v1276, 2
        %v1278 = vadd.f32 %v1276, %v1277
        %v1279 = vrot.slane %v1278, 1
        %v1280 = vadd.f32 %v1278, %v1279
        %v1281 = vsel %vm1233, %v1269, 0.0
        %v1282 = vrot.slane %v1281, 4
        %v1283 = vadd.f32 %v1281, %v1282
        %v1284 = vrot.slane %v1283, 2
        %v1285 = vadd.f32 %v1283, %v1284
        %v1286 = vrot.slane %v1285, 1
        %v1287 = vadd.f32 %v1285, %v1286
        %v1288 = vsel %vm1233, %v1271, 0.0
        %v1289 = vrot.slane %v1288, 4
        %v1290 = vadd.f32 %v1288, %v1289
        %v1291 = vrot.slane %v1290, 2
        %v1292 = vadd.f32 %v1290, %v1291
        %v1293 = vrot.slane %v1292, 1
        %v1294 = vadd.f32 %v1292, %v1293
        %v1295 = vsel %vm1233, %v1273, 0.0
        %v1296 = vrot.slane %v1295, 4
        %v1297 = vadd.f32 %v1295, %v1296
        %v1298 = vrot.slane %v1297, 2
        %v1299 = vadd.f32 %v1297, %v1298
        %v1300 = vrot.slane %v1299, 1
        %v1301 = vadd.f32 %v1299, %v1300
        %v1302 = vrcp.pop %v1280
        %v1303 = vmul.f32 %v1267, %v1302
        %v1304 = vrcp.pop %v1287
        %v1305 = vmul.f32 %v1269, %v1304
        %v1306 = vrcp.pop %v1294
        %v1307 = vmul.f32 %v1271, %v1306
        %v1308 = vrcp.pop %v1301
        %v1309 = vmul.f32 %v1273, %v1308
        %v1314 = vcombine.low %v1303, %v1305
        %v1315 = vcombine.low %v1307, %v1309
        %1318 = vst [vmem:[%s137] sm:$0xff] %v1314
        %1319 = vst [vmem:[%s137 + $0x8] sm:$0xff] %v1315
        %s1320 = sand.u32 %s71, 1
        %s1321 = scalar_lea.sflag [#allocation3], %s1320
        %s1322 = sand.u32 %s71, 1
        %s1323 = smul.addr %s1322, 16
        %s1324 = scalar_lea.vmem [#allocation2], %s1323
        // Predicated region
        $region29: #{tpu_custom_call.1} parent=27 // pred_check
          %p1325 = pneg %p81
        $region30: #{tpu_custom_call.1} parent=27 // pred_check_branch
          %1327 = sbr.rel (%p1325) target = $region32
        $region31: #{tpu_custom_call.1} parent=27 // pred_region
          %s1328 = smul.u32 4, %s16
          %s1330 = ssub.s32 256, 256
          %1331 = vsyncadd %s1321, %s1330
          %s1332 = smul.addr %s1328, 64
          %s1333 = scalar_lea.hbm %s2, %s1332
          %s1335 = sshll.u32 %s1324, 4
          %s1336 = int_to_ptr.vmem [resolvable:$true] %s1335
          %1338 = dma.vmem_to_hbm [thread:$0]  %s1336, 256, %s1333, %s1321
        $region32: #{tpu_custom_call.1} parent=27 // pred_fallthru
          _
      $region28: #{tpu_custom_call.1} parent=5 // pred_fallthru
        _
      %p1339 = scmp.le.s32.totalorder 2, %s11
      // Predicated region
      $region33: #{tpu_custom_call.1} parent=5 // pred_check
        %p1340 = pneg %p1339
      $region34: #{tpu_custom_call.1} parent=5 // pred_check_branch
        %1342 = sbr.rel (%p1340) target = $region36
      $region35: #{tpu_custom_call.1} parent=5 // pred_region
        %s1343 = ssub.s32 %s11, 2
        // Predicated region
        $region37: #{tpu_custom_call.1} parent=35 // pred_check
          %p1344 = pneg %p87
        $region38: #{tpu_custom_call.1} parent=35 // pred_check_branch
          %1346 = sbr.rel (%p1344) target = $region40
        $region39: #{tpu_custom_call.1} parent=35 // pred_region
          %s1347 = sand.u32 %s72, 1
          %s1348 = scalar_lea.sflag [#allocation3], %s1347
          %s1349 = sand.u32 %s72, 1
          %s1350 = smul.addr %s1349, 16
          %s1351 = scalar_lea.vmem [#allocation2], %s1350
          %1352 = dma.done %s1348, 256
        $region40: #{tpu_custom_call.1} parent=35 // pred_fallthru
          _
      $region36: #{tpu_custom_call.1} parent=5 // pred_fallthru
        _
    $region6: #{tpu_custom_call.1} parent=1 // loop_footer
      %s15 = sadd.s32 1, %s11
    $region7: #{tpu_custom_call.1} parent=1 // loop_footer_branch
      %10 = sbr.rel target = $region3
    $region8: #{tpu_custom_call.1} parent=1 // loop_exit
      _
    %1353 = vsyncpa [#allocation3], 1
    %s1354 = scalar_lea.sflag [#allocation3], 1
    %1355 = vsyncpa %s1354, 1

</llo_original>
